<compile_context>
chip_gen: v5e
topology: v5e:2x2
jax: 0.10.0
libtpu: 0.0.40
codegen_flags: <defaults>
</compile_context>

<pallas_src>
import jax
import jax.numpy as jnp
from jax.experimental import pallas as pl
from jax.experimental.pallas import tpu as pltpu

HIDDEN = 256
_LANE = 128
_SUBLANE = 8
# W1 (in the compute dtype) at or below this size is kept fully VMEM-resident.
_W1_RESIDENT_BYTES = 8 << 20


def _round_up(x, m):
    return ((x + m - 1) // m) * m


def _choose_tk(n_feat, itemsize):
    """Pick the K tile and padded K extent for a feature count / dtype size."""
    k_aligned = _round_up(n_feat, _LANE)
    if k_aligned * HIDDEN * itemsize <= _W1_RESIDENT_BYTES:
        return k_aligned, k_aligned                  # resident: single K block
    for cand in (2048, 1024, 512, 256, 128):         # streamed: large K tiles
        if n_feat % cand == 0:
            return cand, n_feat
    return 2048, _round_up(n_feat, 2048)             # rare ragged-K fallback


def _global_quality_kernel(x_ref, w1_ref, b1_ref, w2row_ref, b2_ref, o_ref, h_acc):
    # x_ref    : (tm, tk)       VMEM   input tile (compute dtype)
    # w1_ref   : (tk, 256)      VMEM   first-layer weight tile (compute dtype)
    # b1_ref   : (1, 256)       VMEM   first-layer bias (f32)
    # w2row_ref: (1, 256)       VMEM   second-layer weight as a row (f32)
    # b2_ref   : (1, 1)         SMEM   second-layer bias (scalar, f32)
    # o_ref    : (tm, 1)        VMEM   output tile (f32)
    # h_acc    : (tm, 256) f32  VMEM   hidden-layer accumulator (scratch)
    k = pl.program_id(1)

    @pl.when(k == 0)
    def _():
        h_acc[...] = jnp.zeros_like(h_acc)

    # MXU: accumulate partial x @ W1 over the n_feat (K) tiles in f32.
    h_acc[...] += jnp.dot(x_ref[...], w1_ref[...],
                          preferred_element_type=jnp.float32)

    @pl.when(k == pl.num_programs(1) - 1)
    def _():
        h = jnp.maximum(h_acc[...] + b1_ref[...], 0.0)              # bias + ReLU
        # Second layer has N=1: VPU multiply + cross-lane sum (XLU) instead of a
        # degenerate 1-column MXU matmul.
        out = jnp.sum(h * w2row_ref[...], axis=-1, keepdims=True) + b2_ref[0, 0]
        o_ref[...] = jnp.maximum(out, 0.0).astype(o_ref.dtype)      # final ReLU
        # TODO(synk): lane-dense (1, tm) output store (transpose epilogue) only
        # if the masked (tm, 1) vst ever shows up in the bundle profile.


def prepare_params(w1, b1, w2, b2, compute_dtype=jnp.bfloat16):
    """One-time parameter prep, hoisted out of the per-call path.

    Pads W1 along K to the kernel's K tiling, casts it to the compute dtype and
    reshapes the small tensors into their kernel layouts.
    """
    n_feat, hidden = w1.shape
    assert hidden == HIDDEN
    _, k_pad = _choose_tk(n_feat, jnp.dtype(compute_dtype).itemsize)
    if k_pad != n_feat:                              # zero rows: no-op for the dot
        w1 = jnp.pad(w1, ((0, k_pad - n_feat), (0, 0)))
    w1_p = w1.astype(compute_dtype)
    b1_2d = jnp.asarray(b1, jnp.float32).reshape(1, hidden)
    w2_row = jnp.asarray(w2, jnp.float32).reshape(1, hidden)   # (256,1) -> (1,256)
    b2_2d = jnp.asarray(b2, jnp.float32).reshape(1, 1)
    return w1_p, b1_2d, w2_row, b2_2d


@jax.jit
def global_quality(x_nchw, w1_p, b1_2d, w2_row, b2_2d):
    """Pallas equivalent of GlobalQuality.forward.

    x_nchw: (b, c, h, w);  params come from prepare_params().
    returns (b, 1) float32.
    """
    b = x_nchw.shape[0]
    k_pad, hidden = w1_p.shape
    x = x_nchw.reshape(b, -1)                        # == torch x.view(b, -1)
    n_feat = x.shape[1]
    assert n_feat <= k_pad, "params were prepared for a smaller n_feat"

    itemsize = jnp.dtype(w1_p.dtype).itemsize
    tk, _ = _choose_tk(k_pad, itemsize)              # consistent with prepare_params
    k_tiles = k_pad // tk

    # Cast activation to the compute dtype.  Only pad K when n_feat itself is
    # not lane-alignable (rare); the batch axis is never padded — the last M
    # block may be ragged and its out-of-bounds rows are row-local garbage that
    # never reaches the (masked) output store.
    x = x.astype(w1_p.dtype)
    if k_pad != n_feat:
        x = jnp.pad(x, ((0, 0), (0, k_pad - n_feat)))

    # --- M tiling -------------------------------------------------------------
    device_kind = jax.devices()[0].device_kind.lower()
    is_v5e = ("v5 lite" in device_kind) or ("v5e" in device_kind)
    tm_cap = 128 if is_v5e else 256                  # v6e/v7x MXU is 2x256^2
    if b <= _SUBLANE:
        tm = b                                       # full-dim block, no padding
    else:
        tm = min(tm_cap, _round_up(b, _SUBLANE))
        # Keep the double-buffered x tile modest so big-tk cases stay in budget.
        while tm > _SUBLANE and 2 * tm * tk * itemsize > (16 << 20):
            tm = max(_SUBLANE, (tm // 2) // _SUBLANE * _SUBLANE)
    m_tiles = pl.cdiv(b, tm)
    # TODO(synk): on v7x with a single M tile, shard the 256 hidden columns
    # across the two TensorCores via pl.core_map so both cores' HBM BW is used.

    grid = (m_tiles, k_tiles)

    # --- VMEM budget from the actual buffers (v7x has only 64 MiB) -------------
    need = (2 * tm * tk * itemsize                   # x tile, double buffered
            + 2 * tk * hidden * itemsize             # W1 tile, double buffered
            + tm * hidden * 4                        # f32 accumulator scratch
            + 4 * hidden * 4                         # b1 + w2 rows
            + 2 * tm * _LANE * 4)                    # output tile (lane padded)
    vmem_limit = int(min(48 << 20, max(int(need * 1.5), 32 << 20)))

    w1_reads = 1 if k_tiles == 1 else m_tiles        # resident vs re-streamed
    cost = pl.CostEstimate(
        flops=2 * b * k_pad * hidden + 3 * b * hidden,
        transcendentals=0,
        bytes_accessed=(b * k_pad * itemsize
                        + w1_reads * k_pad * hidden * itemsize
                        + 2 * hidden * 4 + 4 + b * 4),
    )

    out = pl.pallas_call(
        _global_quality_kernel,
        out_shape=jax.ShapeDtypeStruct((b, 1), jnp.float32),
        grid_spec=pltpu.PrefetchScalarGridSpec(
            num_scalar_prefetch=0,
            grid=grid,
            in_specs=[
                pl.BlockSpec((tm, tk), lambda m, k: (m, k)),        # x tile
                pl.BlockSpec((tk, hidden), lambda m, k: (k, 0)),    # W1 tile
                pl.BlockSpec((1, hidden), lambda m, k: (0, 0)),     # b1 row
                pl.BlockSpec((1, hidden), lambda m, k: (0, 0)),     # w2 row
                pl.BlockSpec(memory_space=pltpu.MemorySpace.SMEM),  # b2 scalar
            ],
            out_specs=pl.BlockSpec((tm, 1), lambda m, k: (m, 0)),
            scratch_shapes=[pltpu.VMEM((tm, hidden), jnp.float32)],
        ),
        compiler_params=pltpu.CompilerParams(
            dimension_semantics=("parallel", "arbitrary"),
            vmem_limit_bytes=vmem_limit,
        ),
        cost_estimate=cost,
    )(x, w1_p, b1_2d, w2_row, b2_2d)

    return out


def init_params(key, n_feat, hidden=HIDDEN):
    """Deterministic synthetic parameter init (shapes match nn.Linear)."""
    k1, k2, k3, k4 = jax.random.split(key, 4)
    # stored as (in, out) so the kernel does x @ W
    w1 = jax.random.normal(k1, (n_feat, hidden), jnp.float32) * (1.0 / jnp.sqrt(n_feat))
    b1 = jax.random.normal(k2, (hidden,), jnp.float32) * 0.01
    w2 = jax.random.normal(k3, (hidden, 1), jnp.float32) * (1.0 / jnp.sqrt(hidden))
    b2 = jax.random.normal(k4, (1,), jnp.float32) * 0.01
    return w1, b1, w2, b2


def reference(x_nchw, w1, b1, w2, b2):
    """Pure-JAX reference of the PyTorch forward."""
    b = x_nchw.shape[0]
    x = x_nchw.reshape(b, -1)
    h = jnp.maximum(x @ w1 + b1, 0.0)
    return jnp.maximum(h @ w2 + b2, 0.0)


if __name__ == "__main__":
    # Small shapes consistent with the module: n_feat = c*h*w = 4*16*16 = 1024
    B, C, H, W = 2, 4, 16, 16
    n_feat = C * H * W

    key = jax.random.PRNGKey(0)
    kx, kp = jax.random.split(key)
    x = jax.random.normal(kx, (B, C, H, W), jnp.float32)
    w1, b1, w2, b2 = init_params(kp, n_feat)

    # --- f32 validation path: exact match against the reference ---------------
    params_f32 = prepare_params(w1, b1, w2, b2, compute_dtype=jnp.float32)
    out_f32 = jax.block_until_ready(global_quality(x, *params_f32))
    ref = reference(x, w1, b1, w2, b2)
    assert out_f32.shape == (B, 1), out_f32.shape
    assert jnp.allclose(out_f32, ref, atol=1e-4, rtol=1e-4), "f32 mismatch vs reference"

    # --- default bf16 fast path: compare against a bf16-rounded reference -----
    params_bf16 = prepare_params(w1, b1, w2, b2)          # bfloat16 compute dtype
    out_bf16 = jax.block_until_ready(global_quality(x, *params_bf16))
    ref_bf16 = reference(x.astype(jnp.bfloat16).astype(jnp.float32),
                         w1.astype(jnp.bfloat16).astype(jnp.float32), b1, w2, b2)
    assert out_bf16.shape == (B, 1), out_bf16.shape
    assert jnp.allclose(out_bf16, ref_bf16, atol=1e-2, rtol=1e-2), "bf16 mismatch vs reference"

    print("KERNEL_OK")
</pallas_src>

<mosaic_0001>
module attributes {stable_mosaic.version = 11 : i64} {
  func.func @_global_quality_kernel(%arg0: i32, %arg1: i32, %arg2: memref<2x1024xf32, #tpu.memory_space<vmem>>, %arg3: memref<1024x256xf32, #tpu.memory_space<vmem>>, %arg4: memref<1x256xf32, #tpu.memory_space<vmem>>, %arg5: memref<1x256xf32, #tpu.memory_space<vmem>>, %arg6: memref<1x1xf32, #tpu.memory_space<smem>>, %arg7: memref<2x1xf32, #tpu.memory_space<vmem>>, %arg8: memref<2x256xf32, #tpu.memory_space<vmem>>) attributes {dimension_semantics = [#tpu.dimension_semantics<parallel>, #tpu.dimension_semantics<arbitrary>], iteration_bounds = array<i64: 1, 1>, scalar_prefetch = 0 : i64, scratch_operands = 1 : i64, tpu.core_type = #tpu.core_type<tc>, window_params = [{transform_indices = @transform_0, window_bounds = array<i64: 2, 1024>}, {transform_indices = @transform_1, window_bounds = array<i64: 1024, 256>}, {pipeline_mode = #tpu.pipeline_mode<synchronous>, transform_indices = @transform_2, window_bounds = array<i64: 1, 256>}, {pipeline_mode = #tpu.pipeline_mode<synchronous>, transform_indices = @transform_3, window_bounds = array<i64: 1, 256>}, {transform_indices = @transform_4, window_bounds = array<i64: 1, 1>}, {transform_indices = @transform_5, window_bounds = array<i64: 2, 1>}]} {
    %c0_i32 = arith.constant 0 : i32
    %0 = arith.cmpi eq, %arg1, %c0_i32 : i32
    %1 = arith.extui %0 : i1 to i32
    %c0_i32_0 = arith.constant 0 : i32
    %2 = arith.cmpi ne, %1, %c0_i32_0 : i32
    scf.if %2 {
      %cst_10 = arith.constant 0.000000e+00 : f32
      %12 = vector.broadcast %cst_10 : f32 to vector<2x256xf32>
      %c0_11 = arith.constant 0 : index
      %c0_12 = arith.constant 0 : index
      %13 = vector.load %arg8[%c0_11, %c0_12] : memref<2x256xf32, #tpu.memory_space<vmem>>, vector<2x256xf32>
      tpu.vector_store %arg8[%c0_11, %c0_12], %12 {strides = array<i32>} : memref<2x256xf32, #tpu.memory_space<vmem>>, vector<2x256xf32>,
    } else {
    }
    %c0 = arith.constant 0 : index
    %c0_1 = arith.constant 0 : index
    %3 = vector.load %arg8[%c0, %c0_1] : memref<2x256xf32, #tpu.memory_space<vmem>>, vector<2x256xf32>
    %c0_2 = arith.constant 0 : index
    %c0_3 = arith.constant 0 : index
    %4 = vector.load %arg2[%c0_2, %c0_3] : memref<2x1024xf32, #tpu.memory_space<vmem>>, vector<2x1024xf32>
    %c0_4 = arith.constant 0 : index
    %c0_5 = arith.constant 0 : index
    %5 = vector.load %arg3[%c0_4, %c0_5] : memref<1024x256xf32, #tpu.memory_space<vmem>>, vector<1024x256xf32>
    %cst = arith.constant dense<0.000000e+00> : vector<2x256xf32>
    %6 = tpu.matmul %4, %5, %cst {dimension_numbers = #tpu.dot_dimension_numbers<[1], [0], [0], [1], [0, 0, 1, 1], [], []>} : vector<2x1024xf32>, vector<1024x256xf32>, vector<2x256xf32> -> vector<2x256xf32>
    %7 = arith.addf %3, %6 : vector<2x256xf32>
    %c0_6 = arith.constant 0 : index
    %c0_7 = arith.constant 0 : index
    %8 = vector.load %arg8[%c0_6, %c0_7] : memref<2x256xf32, #tpu.memory_space<vmem>>, vector<2x256xf32>
    tpu.vector_store %arg8[%c0_6, %c0_7], %7 {strides = array<i32>} : memref<2x256xf32, #tpu.memory_space<vmem>>, vector<2x256xf32>,
    %c0_i32_8 = arith.constant 0 : i32
    %9 = arith.cmpi eq, %arg1, %c0_i32_8 : i32
    %10 = arith.extui %9 : i1 to i32
    %c0_i32_9 = arith.constant 0 : i32
    %11 = arith.cmpi ne, %10, %c0_i32_9 : i32
    scf.if %11 {
      %c0_10 = arith.constant 0 : index
      %c0_11 = arith.constant 0 : index
      %12 = vector.load %arg8[%c0_10, %c0_11] : memref<2x256xf32, #tpu.memory_space<vmem>>, vector<2x256xf32>
      %c0_12 = arith.constant 0 : index
      %c0_13 = arith.constant 0 : index
      %13 = vector.load %arg4[%c0_12, %c0_13] : memref<1x256xf32, #tpu.memory_space<vmem>>, vector<1x256xf32>
      %14 = vector.broadcast %13 : vector<1x256xf32> to vector<2x256xf32>
      %15 = arith.addf %12, %14 : vector<2x256xf32>
      %cst_14 = arith.constant 0.000000e+00 : f32
      %16 = vector.broadcast %cst_14 : f32 to vector<2x256xf32>
      %17 = arith.maximumf %15, %16 : vector<2x256xf32>
      %c0_15 = arith.constant 0 : index
      %c0_16 = arith.constant 0 : index
      %18 = vector.load %arg5[%c0_15, %c0_16] : memref<1x256xf32, #tpu.memory_space<vmem>>, vector<1x256xf32>
      %19 = vector.broadcast %18 : vector<1x256xf32> to vector<2x256xf32>
      %20 = arith.mulf %17, %19 : vector<2x256xf32>
      %cst_17 = arith.constant dense<0.000000e+00> : vector<2xf32>
      %21 = vector.multi_reduction <add>, %20, %cst_17 [1] : vector<2x256xf32> to vector<2xf32>
      %22 = vector.shape_cast %21 : vector<2xf32> to vector<2x1xf32>
      %c0_18 = arith.constant 0 : index
      %c0_19 = arith.constant 0 : index
      %23 = memref.load %arg6[%c0_18, %c0_19] : memref<1x1xf32, #tpu.memory_space<smem>>
      %24 = vector.broadcast %23 : f32 to vector<2x1xf32>
      %25 = arith.addf %22, %24 : vector<2x1xf32>
      %cst_20 = arith.constant 0.000000e+00 : f32
      %26 = vector.broadcast %cst_20 : f32 to vector<2x1xf32>
      %27 = arith.maximumf %25, %26 : vector<2x1xf32>
      %c0_21 = arith.constant 0 : index
      %c0_22 = arith.constant 0 : index
      %28 = vector.load %arg7[%c0_21, %c0_22] : memref<2x1xf32, #tpu.memory_space<vmem>>, vector<2x1xf32>
      tpu.vector_store %arg7[%c0_21, %c0_22], %27 {strides = array<i32>} : memref<2x1xf32, #tpu.memory_space<vmem>>, vector<2x1xf32>,
    } else {
    }
    return
  }
  func.func @transform_0(%arg0: i32, %arg1: i32) -> (i32, i32) {
    %c0_i32 = arith.constant 0 : i32
    return %arg0, %arg1 : i32, i32
  }
  func.func @transform_1(%arg0: i32, %arg1: i32) -> (i32, i32) {
    %c0_i32 = arith.constant 0 : i32
    %c0_i32_0 = arith.constant 0 : i32
    return %arg1, %c0_i32 : i32, i32
  }
  func.func @transform_2(%arg0: i32, %arg1: i32) -> (i32, i32) {
    %c0_i32 = arith.constant 0 : i32
    %c0_i32_0 = arith.constant 0 : i32
    %c0_i32_1 = arith.constant 0 : i32
    return %c0_i32, %c0_i32_0 : i32, i32
  }
  func.func @transform_3(%arg0: i32, %arg1: i32) -> (i32, i32) {
    %c0_i32 = arith.constant 0 : i32
    %c0_i32_0 = arith.constant 0 : i32
    %c0_i32_1 = arith.constant 0 : i32
    return %c0_i32, %c0_i32_0 : i32, i32
  }
  func.func @transform_4(%arg0: i32, %arg1: i32) -> (i32, i32) {
    %c0_i32 = arith.constant 0 : i32
    %c0_i32_0 = arith.constant 0 : i32
    %c0_i32_1 = arith.constant 0 : i32
    return %c0_i32, %c0_i32_0 : i32, i32
  }
  func.func @transform_5(%arg0: i32, %arg1: i32) -> (i32, i32) {
    %c0_i32 = arith.constant 0 : i32
    %c0_i32_0 = arith.constant 0 : i32
    return %arg0, %c0_i32 : i32, i32
  }
}

</mosaic_0001>

<llo_original>
// kernel: global_quality.1
$region0: #{global_quality.1}
  #allocation0 [shape = 'u32[]', space=smem, size = 0x4, offset = 0x4, fixed_abs, tag = 'smem constant byte address 0x4 - core index']
  #allocation1 [shape = 'u32[72,128]{1,0:T(1,128)}', space=vmem, size = 0x9000, scoped, tag = 'internal scratch']
  #allocation2 [shape = 'f32[2,256]{1,0:T(2,128)}', space=vmem, size = 0x800, scoped, tag = 'scratch operand']
  #allocation3 [shape = 'f32[1,1]{1,0:T(1,128)S(6)}', space=smem, size = 0x200, scoped, tag = 'scoped memory for global_quality.1']
  %s0 = inlined_call_operand.vmem [shape: f32[2,1024], index: 0, kind: input, shape index: {}]
  %s1 = inlined_call_operand.hbm [shape: f32[1024,256], index: 1, kind: input, shape index: {}]
  %s2 = inlined_call_operand.vmem [shape: f32[1,256], index: 2, kind: input, shape index: {}]
  %s3 = inlined_call_operand.vmem [shape: f32[1,256], index: 3, kind: input, shape index: {}]
  %s4 = inlined_call_operand.<no memory space> [shape: f32[1,1], index: 4, kind: input, shape index: {}]
  %s5 = inlined_call_operand.vmem [shape: f32[2,1], index: 5, kind: output, shape index: {}]
  %s6 = sld [smem:[#allocation0]]
  $region42: #{global_quality.1} parent=0
    _
  %s8 = ssub.s32 1, %s6
  %s9 = scalar_select 0, %s8, %s6
  %10 = sst [smem:[#allocation3]] %s4
  $region1: #{global_quality.1} parent=0
    #allocation4 [shape = 'u8[1048576]{0}', space=vmem, size = 0x100000, scoped, tag = 'input window, operand 1, single buffered']
    #allocation5 [shape = 's32[1]{0}', space=sflag, size = 0x4, scoped, tag = 'scoped memory for global_quality.1']
    %11 = vsyncpa [#allocation5], 0
    // Predicated region
    $region2: #{global_quality.1} parent=1 // pred_check
      _
    $region3: #{global_quality.1} parent=1 // pred_check_branch
      %13 = sbr.rel (0) target = $region5
    $region4: #{global_quality.1} parent=1 // pred_region
      _
    $region5: #{global_quality.1} parent=1 // pred_fallthru
      _
    // Predicated region
    $region6: #{global_quality.1} parent=1 // pred_check
      _
    $region7: #{global_quality.1} parent=1 // pred_check_branch
      %15 = sbr.rel (0) target = $region9
    $region8: #{global_quality.1} parent=1 // pred_region
      %17 = vsyncadd [#allocation5], 0
      %s18 = sshll.u32 %s1, 4
      %s19 = int_to_ptr.hbm [resolvable:$true] %s18
      %s20 = sshll.u32 [#allocation4], 4
      %s21 = int_to_ptr.vmem [resolvable:$true] %s20
      %26 = dma.hbm_to_vmem [thread:$0]  %s19, 32768, %s21, [#allocation5], 256, 256, 16
    $region9: #{global_quality.1} parent=1 // pred_fallthru
      _
    // Predicated region
    $region10: #{global_quality.1} parent=1 // pred_check
      _
    $region11: #{global_quality.1} parent=1 // pred_check_branch
      %28 = sbr.rel (0) target = $region13
    $region12: #{global_quality.1} parent=1 // pred_region
      _
    $region13: #{global_quality.1} parent=1 // pred_fallthru
      _
    // Predicated region
    $region14: #{global_quality.1} parent=1 // pred_check
      _
    $region15: #{global_quality.1} parent=1 // pred_check_branch
      %30 = sbr.rel (0) target = $region17
    $region16: #{global_quality.1} parent=1 // pred_region
      _
    $region17: #{global_quality.1} parent=1 // pred_fallthru
      _
    // Predicated region
    $region18: #{global_quality.1} parent=1 // pred_check
      _
    $region19: #{global_quality.1} parent=1 // pred_check_branch
      %32 = sbr.rel (0) target = $region21
    $region20: #{global_quality.1} parent=1 // pred_region
      _
    $region21: #{global_quality.1} parent=1 // pred_fallthru
      _
    // Predicated region
    $region22: #{global_quality.1} parent=1 // pred_check
      _
    $region23: #{global_quality.1} parent=1 // pred_check_branch
      %34 = sbr.rel (0) target = $region25
    $region24: #{global_quality.1} parent=1 // pred_region
      %36 = dma.done [#allocation5], 32768
    $region25: #{global_quality.1} parent=1 // pred_fallthru
      _
    %p37 = scmp.eq.s32.totalorder 0, 0
    // Predicated region
    $region26: #{global_quality.1} parent=1 // pred_check
      %p38 = pneg %p37
    $region27: #{global_quality.1} parent=1 // pred_check_branch
      %40 = sbr.rel (%p38) target = $region29
    $region28: #{global_quality.1} parent=1 // pred_region
      %41 = vst [vmem:[#allocation2] sm:$0xf] 0.0
    $region29: #{global_quality.1} parent=1 // pred_fallthru
      _
    %v42 = vld [vmem:[#allocation2] sm:$0xf]
    %v43 = vld [vmem:[%s0] sm:$0xff]
    %v44 = vld [vmem:[%s0 + $0x8] sm:$0xff]
    %v45 = vld [vmem:[#allocation4] sm:$0xff]
    %v46 = vld [vmem:[#allocation4 + $0x8] sm:$0xff]
    %v47 = vld [vmem:[#allocation4 + $0x10] sm:$0xff]
    %v48 = vld [vmem:[#allocation4 + $0x18] sm:$0xff]
    %v49 = vld [vmem:[#allocation4 + $0x20] sm:$0xff]
    %v50 = vld [vmem:[#allocation4 + $0x28] sm:$0xff]
    %v51 = vld [vmem:[#allocation4 + $0x30] sm:$0xff]
    %v52 = vld [vmem:[#allocation4 + $0x38] sm:$0xff]
    %v53 = vld [vmem:[#allocation4 + $0x40] sm:$0xff]
    %v54 = vld [vmem:[#allocation4 + $0x48] sm:$0xff]
    %v55 = vld [vmem:[#allocation4 + $0x50] sm:$0xff]
    %v56 = vld [vmem:[#allocation4 + $0x58] sm:$0xff]
    %v57 = vld [vmem:[#allocation4 + $0x60] sm:$0xff]
    %v58 = vld [vmem:[#allocation4 + $0x68] sm:$0xff]
    %v59 = vld [vmem:[#allocation4 + $0x70] sm:$0xff]
    %v60 = vld [vmem:[#allocation4 + $0x78] sm:$0xff]
    %v61 = vld [vmem:[#allocation4 + $0x80] sm:$0xff]
    %v62 = vld [vmem:[#allocation4 + $0x88] sm:$0xff]
    %v63 = vld [vmem:[#allocation4 + $0x90] sm:$0xff]
    %v64 = vld [vmem:[#allocation4 + $0x98] sm:$0xff]
    %v65 = vld [vmem:[#allocation4 + $0xa0] sm:$0xff]
    %v66 = vld [vmem:[#allocation4 + $0xa8] sm:$0xff]
    %v67 = vld [vmem:[#allocation4 + $0xb0] sm:$0xff]
    %v68 = vld [vmem:[#allocation4 + $0xb8] sm:$0xff]
    %v69 = vld [vmem:[#allocation4 + $0xc0] sm:$0xff]
    %v70 = vld [vmem:[#allocation4 + $0xc8] sm:$0xff]
    %v71 = vld [vmem:[#allocation4 + $0xd0] sm:$0xff]
    %v72 = vld [vmem:[#allocation4 + $0xd8] sm:$0xff]
    %v73 = vld [vmem:[#allocation4 + $0xe0] sm:$0xff]
    %v74 = vld [vmem:[#allocation4 + $0xe8] sm:$0xff]
    %v75 = vld [vmem:[#allocation4 + $0xf0] sm:$0xff]
    %v76 = vld [vmem:[#allocation4 + $0xf8] sm:$0xff]
    %v77 = vld [vmem:[#allocation4 + $0x100] sm:$0xff]
    %v78 = vld [vmem:[#allocation4 + $0x108] sm:$0xff]
    %v79 = vld [vmem:[#allocation4 + $0x110] sm:$0xff]
    %v80 = vld [vmem:[#allocation4 + $0x118] sm:$0xff]
    %v81 = vld [vmem:[#allocation4 + $0x120] sm:$0xff]
    %v82 = vld [vmem:[#allocation4 + $0x128] sm:$0xff]
    %v83 = vld [vmem:[#allocation4 + $0x130] sm:$0xff]
    %v84 = vld [vmem:[#allocation4 + $0x138] sm:$0xff]
    %v85 = vld [vmem:[#allocation4 + $0x140] sm:$0xff]
    %v86 = vld [vmem:[#allocation4 + $0x148] sm:$0xff]
    %v87 = vld [vmem:[#allocation4 + $0x150] sm:$0xff]
    %v88 = vld [vmem:[#allocation4 + $0x158] sm:$0xff]
    %v89 = vld [vmem:[#allocation4 + $0x160] sm:$0xff]
    %v90 = vld [vmem:[#allocation4 + $0x168] sm:$0xff]
    %v91 = vld [vmem:[#allocation4 + $0x170] sm:$0xff]
    %v92 = vld [vmem:[#allocation4 + $0x178] sm:$0xff]
    %v93 = vld [vmem:[#allocation4 + $0x180] sm:$0xff]
    %v94 = vld [vmem:[#allocation4 + $0x188] sm:$0xff]
    %v95 = vld [vmem:[#allocation4 + $0x190] sm:$0xff]
    %v96 = vld [vmem:[#allocation4 + $0x198] sm:$0xff]
    %v97 = vld [vmem:[#allocation4 + $0x1a0] sm:$0xff]
    %v98 = vld [vmem:[#allocation4 + $0x1a8] sm:$0xff]
    %v99 = vld [vmem:[#allocation4 + $0x1b0] sm:$0xff]
    %v100 = vld [vmem:[#allocation4 + $0x1b8] sm:$0xff]
    %v101 = vld [vmem:[#allocation4 + $0x1c0] sm:$0xff]
    %v102 = vld [vmem:[#allocation4 + $0x1c8] sm:$0xff]
    %v103 = vld [vmem:[#allocation4 + $0x1d0] sm:$0xff]
    %v104 = vld [vmem:[#allocation4 + $0x1d8] sm:$0xff]
    %v105 = vld [vmem:[#allocation4 + $0x1e0] sm:$0xff]
    %v106 = vld [vmem:[#allocation4 + $0x1e8] sm:$0xff]
    %v107 = vld [vmem:[#allocation4 + $0x1f0] sm:$0xff]
    %v108 = vld [vmem:[#allocation4 + $0x1f8] sm:$0xff]
    %v109 = vld [vmem:[#allocation4 + $0x200] sm:$0xff]
    %v110 = vld [vmem:[#allocation4 + $0x208] sm:$0xff]
    %v111 = vld [vmem:[#allocation4 + $0x210] sm:$0xff]
    %v112 = vld [vmem:[#allocation4 + $0x218] sm:$0xff]
    %v113 = vld [vmem:[#allocation4 + $0x220] sm:$0xff]
    %v114 = vld [vmem:[#allocation4 + $0x228] sm:$0xff]
    %v115 = vld [vmem:[#allocation4 + $0x230] sm:$0xff]
    %v116 = vld [vmem:[#allocation4 + $0x238] sm:$0xff]
    %v117 = vld [vmem:[#allocation4 + $0x240] sm:$0xff]
    %v118 = vld [vmem:[#allocation4 + $0x248] sm:$0xff]
    %v119 = vld [vmem:[#allocation4 + $0x250] sm:$0xff]
    %v120 = vld [vmem:[#allocation4 + $0x258] sm:$0xff]
    %v121 = vld [vmem:[#allocation4 + $0x260] sm:$0xff]
    %v122 = vld [vmem:[#allocation4 + $0x268] sm:$0xff]
    %v123 = vld [vmem:[#allocation4 + $0x270] sm:$0xff]
    %v124 = vld [vmem:[#allocation4 + $0x278] sm:$0xff]
    %v125 = vld [vmem:[#allocation4 + $0x280] sm:$0xff]
    %v126 = vld [vmem:[#allocation4 + $0x288] sm:$0xff]
    %v127 = vld [vmem:[#allocation4 + $0x290] sm:$0xff]
    %v128 = vld [vmem:[#allocation4 + $0x298] sm:$0xff]
    %v129 = vld [vmem:[#allocation4 + $0x2a0] sm:$0xff]
    %v130 = vld [vmem:[#allocation4 + $0x2a8] sm:$0xff]
    %v131 = vld [vmem:[#allocation4 + $0x2b0] sm:$0xff]
    %v132 = vld [vmem:[#allocation4 + $0x2b8] sm:$0xff]
    %v133 = vld [vmem:[#allocation4 + $0x2c0] sm:$0xff]
    %v134 = vld [vmem:[#allocation4 + $0x2c8] sm:$0xff]
    %v135 = vld [vmem:[#allocation4 + $0x2d0] sm:$0xff]
    %v136 = vld [vmem:[#allocation4 + $0x2d8] sm:$0xff]
    %v137 = vld [vmem:[#allocation4 + $0x2e0] sm:$0xff]
    %v138 = vld [vmem:[#allocation4 + $0x2e8] sm:$0xff]
    %v139 = vld [vmem:[#allocation4 + $0x2f0] sm:$0xff]
    %v140 = vld [vmem:[#allocation4 + $0x2f8] sm:$0xff]
    %v141 = vld [vmem:[#allocation4 + $0x300] sm:$0xff]
    %v142 = vld [vmem:[#allocation4 + $0x308] sm:$0xff]
    %v143 = vld [vmem:[#allocation4 + $0x310] sm:$0xff]
    %v144 = vld [vmem:[#allocation4 + $0x318] sm:$0xff]
    %v145 = vld [vmem:[#allocation4 + $0x320] sm:$0xff]
    %v146 = vld [vmem:[#allocation4 + $0x328] sm:$0xff]
    %v147 = vld [vmem:[#allocation4 + $0x330] sm:$0xff]
    %v148 = vld [vmem:[#allocation4 + $0x338] sm:$0xff]
    %v149 = vld [vmem:[#allocation4 + $0x340] sm:$0xff]
    %v150 = vld [vmem:[#allocation4 + $0x348] sm:$0xff]
    %v151 = vld [vmem:[#allocation4 + $0x350] sm:$0xff]
    %v152 = vld [vmem:[#allocation4 + $0x358] sm:$0xff]
    %v153 = vld [vmem:[#allocation4 + $0x360] sm:$0xff]
    %v154 = vld [vmem:[#allocation4 + $0x368] sm:$0xff]
    %v155 = vld [vmem:[#allocation4 + $0x370] sm:$0xff]
    %v156 = vld [vmem:[#allocation4 + $0x378] sm:$0xff]
    %v157 = vld [vmem:[#allocation4 + $0x380] sm:$0xff]
    %v158 = vld [vmem:[#allocation4 + $0x388] sm:$0xff]
    %v159 = vld [vmem:[#allocation4 + $0x390] sm:$0xff]
    %v160 = vld [vmem:[#allocation4 + $0x398] sm:$0xff]
    %v161 = vld [vmem:[#allocation4 + $0x3a0] sm:$0xff]
    %v162 = vld [vmem:[#allocation4 + $0x3a8] sm:$0xff]
    %v163 = vld [vmem:[#allocation4 + $0x3b0] sm:$0xff]
    %v164 = vld [vmem:[#allocation4 + $0x3b8] sm:$0xff]
    %v165 = vld [vmem:[#allocation4 + $0x3c0] sm:$0xff]
    %v166 = vld [vmem:[#allocation4 + $0x3c8] sm:$0xff]
    %v167 = vld [vmem:[#allocation4 + $0x3d0] sm:$0xff]
    %v168 = vld [vmem:[#allocation4 + $0x3d8] sm:$0xff]
    %v169 = vld [vmem:[#allocation4 + $0x3e0] sm:$0xff]
    %v170 = vld [vmem:[#allocation4 + $0x3e8] sm:$0xff]
    %v171 = vld [vmem:[#allocation4 + $0x3f0] sm:$0xff]
    %v172 = vld [vmem:[#allocation4 + $0x3f8] sm:$0xff]
    %v173 = vld [vmem:[#allocation4 + $0x400] sm:$0xff]
    %v174 = vld [vmem:[#allocation4 + $0x408] sm:$0xff]
    %v175 = vld [vmem:[#allocation4 + $0x410] sm:$0xff]
    %v176 = vld [vmem:[#allocation4 + $0x418] sm:$0xff]
    %v177 = vld [vmem:[#allocation4 + $0x420] sm:$0xff]
    %v178 = vld [vmem:[#allocation4 + $0x428] sm:$0xff]
    %v179 = vld [vmem:[#allocation4 + $0x430] sm:$0xff]
    %v180 = vld [vmem:[#allocation4 + $0x438] sm:$0xff]
    %v181 = vld [vmem:[#allocation4 + $0x440] sm:$0xff]
    %v182 = vld [vmem:[#allocation4 + $0x448] sm:$0xff]
    %v183 = vld [vmem:[#allocation4 + $0x450] sm:$0xff]
    %v184 = vld [vmem:[#allocation4 + $0x458] sm:$0xff]
    %v185 = vld [vmem:[#allocation4 + $0x460] sm:$0xff]
    %v186 = vld [vmem:[#allocation4 + $0x468] sm:$0xff]
    %v187 = vld [vmem:[#allocation4 + $0x470] sm:$0xff]
    %v188 = vld [vmem:[#allocation4 + $0x478] sm:$0xff]
    %v189 = vld [vmem:[#allocation4 + $0x480] sm:$0xff]
    %v190 = vld [vmem:[#allocation4 + $0x488] sm:$0xff]
    %v191 = vld [vmem:[#allocation4 + $0x490] sm:$0xff]
    %v192 = vld [vmem:[#allocation4 + $0x498] sm:$0xff]
    %v193 = vld [vmem:[#allocation4 + $0x4a0] sm:$0xff]
    %v194 = vld [vmem:[#allocation4 + $0x4a8] sm:$0xff]
    %v195 = vld [vmem:[#allocation4 + $0x4b0] sm:$0xff]
    %v196 = vld [vmem:[#allocation4 + $0x4b8] sm:$0xff]
    %v197 = vld [vmem:[#allocation4 + $0x4c0] sm:$0xff]
    %v198 = vld [vmem:[#allocation4 + $0x4c8] sm:$0xff]
    %v199 = vld [vmem:[#allocation4 + $0x4d0] sm:$0xff]
    %v200 = vld [vmem:[#allocation4 + $0x4d8] sm:$0xff]
    %v201 = vld [vmem:[#allocation4 + $0x4e0] sm:$0xff]
    %v202 = vld [vmem:[#allocation4 + $0x4e8] sm:$0xff]
    %v203 = vld [vmem:[#allocation4 + $0x4f0] sm:$0xff]
    %v204 = vld [vmem:[#allocation4 + $0x4f8] sm:$0xff]
    %v205 = vld [vmem:[#allocation4 + $0x500] sm:$0xff]
    %v206 = vld [vmem:[#allocation4 + $0x508] sm:$0xff]
    %v207 = vld [vmem:[#allocation4 + $0x510] sm:$0xff]
    %v208 = vld [vmem:[#allocation4 + $0x518] sm:$0xff]
    %v209 = vld [vmem:[#allocation4 + $0x520] sm:$0xff]
    %v210 = vld [vmem:[#allocation4 + $0x528] sm:$0xff]
    %v211 = vld [vmem:[#allocation4 + $0x530] sm:$0xff]
    %v212 = vld [vmem:[#allocation4 + $0x538] sm:$0xff]
    %v213 = vld [vmem:[#allocation4 + $0x540] sm:$0xff]
    %v214 = vld [vmem:[#allocation4 + $0x548] sm:$0xff]
    %v215 = vld [vmem:[#allocation4 + $0x550] sm:$0xff]
    %v216 = vld [vmem:[#allocation4 + $0x558] sm:$0xff]
    %v217 = vld [vmem:[#allocation4 + $0x560] sm:$0xff]
    %v218 = vld [vmem:[#allocation4 + $0x568] sm:$0xff]
    %v219 = vld [vmem:[#allocation4 + $0x570] sm:$0xff]
    %v220 = vld [vmem:[#allocation4 + $0x578] sm:$0xff]
    %v221 = vld [vmem:[#allocation4 + $0x580] sm:$0xff]
    %v222 = vld [vmem:[#allocation4 + $0x588] sm:$0xff]
    %v223 = vld [vmem:[#allocation4 + $0x590] sm:$0xff]
    %v224 = vld [vmem:[#allocation4 + $0x598] sm:$0xff]
    %v225 = vld [vmem:[#allocation4 + $0x5a0] sm:$0xff]
    %v226 = vld [vmem:[#allocation4 + $0x5a8] sm:$0xff]
    %v227 = vld [vmem:[#allocation4 + $0x5b0] sm:$0xff]
    %v228 = vld [vmem:[#allocation4 + $0x5b8] sm:$0xff]
    %v229 = vld [vmem:[#allocation4 + $0x5c0] sm:$0xff]
    %v230 = vld [vmem:[#allocation4 + $0x5c8] sm:$0xff]
    %v231 = vld [vmem:[#allocation4 + $0x5d0] sm:$0xff]
    %v232 = vld [vmem:[#allocation4 + $0x5d8] sm:$0xff]
    %v233 = vld [vmem:[#allocation4 + $0x5e0] sm:$0xff]
    %v234 = vld [vmem:[#allocation4 + $0x5e8] sm:$0xff]
    %v235 = vld [vmem:[#allocation4 + $0x5f0] sm:$0xff]
    %v236 = vld [vmem:[#allocation4 + $0x5f8] sm:$0xff]
    %v237 = vld [vmem:[#allocation4 + $0x600] sm:$0xff]
    %v238 = vld [vmem:[#allocation4 + $0x608] sm:$0xff]
    %v239 = vld [vmem:[#allocation4 + $0x610] sm:$0xff]
    %v240 = vld [vmem:[#allocation4 + $0x618] sm:$0xff]
    %v241 = vld [vmem:[#allocation4 + $0x620] sm:$0xff]
    %v242 = vld [vmem:[#allocation4 + $0x628] sm:$0xff]
    %v243 = vld [vmem:[#allocation4 + $0x630] sm:$0xff]
    %v244 = vld [vmem:[#allocation4 + $0x638] sm:$0xff]
    %v245 = vld [vmem:[#allocation4 + $0x640] sm:$0xff]
    %v246 = vld [vmem:[#allocation4 + $0x648] sm:$0xff]
    %v247 = vld [vmem:[#allocation4 + $0x650] sm:$0xff]
    %v248 = vld [vmem:[#allocation4 + $0x658] sm:$0xff]
    %v249 = vld [vmem:[#allocation4 + $0x660] sm:$0xff]
    %v250 = vld [vmem:[#allocation4 + $0x668] sm:$0xff]
    %v251 = vld [vmem:[#allocation4 + $0x670] sm:$0xff]
    %v252 = vld [vmem:[#allocation4 + $0x678] sm:$0xff]
    %v253 = vld [vmem:[#allocation4 + $0x680] sm:$0xff]
    %v254 = vld [vmem:[#allocation4 + $0x688] sm:$0xff]
    %v255 = vld [vmem:[#allocation4 + $0x690] sm:$0xff]
    %v256 = vld [vmem:[#allocation4 + $0x698] sm:$0xff]
    %v257 = vld [vmem:[#allocation4 + $0x6a0] sm:$0xff]
    %v258 = vld [vmem:[#allocation4 + $0x6a8] sm:$0xff]
    %v259 = vld [vmem:[#allocation4 + $0x6b0] sm:$0xff]
    %v260 = vld [vmem:[#allocation4 + $0x6b8] sm:$0xff]
    %v261 = vld [vmem:[#allocation4 + $0x6c0] sm:$0xff]
    %v262 = vld [vmem:[#allocation4 + $0x6c8] sm:$0xff]
    %v263 = vld [vmem:[#allocation4 + $0x6d0] sm:$0xff]
    %v264 = vld [vmem:[#allocation4 + $0x6d8] sm:$0xff]
    %v265 = vld [vmem:[#allocation4 + $0x6e0] sm:$0xff]
    %v266 = vld [vmem:[#allocation4 + $0x6e8] sm:$0xff]
    %v267 = vld [vmem:[#allocation4 + $0x6f0] sm:$0xff]
    %v268 = vld [vmem:[#allocation4 + $0x6f8] sm:$0xff]
    %v269 = vld [vmem:[#allocation4 + $0x700] sm:$0xff]
    %v270 = vld [vmem:[#allocation4 + $0x708] sm:$0xff]
    %v271 = vld [vmem:[#allocation4 + $0x710] sm:$0xff]
    %v272 = vld [vmem:[#allocation4 + $0x718] sm:$0xff]
    %v273 = vld [vmem:[#allocation4 + $0x720] sm:$0xff]
    %v274 = vld [vmem:[#allocation4 + $0x728] sm:$0xff]
    %v275 = vld [vmem:[#allocation4 + $0x730] sm:$0xff]
    %v276 = vld [vmem:[#allocation4 + $0x738] sm:$0xff]
    %v277 = vld [vmem:[#allocation4 + $0x740] sm:$0xff]
    %v278 = vld [vmem:[#allocation4 + $0x748] sm:$0xff]
    %v279 = vld [vmem:[#allocation4 + $0x750] sm:$0xff]
    %v280 = vld [vmem:[#allocation4 + $0x758] sm:$0xff]
    %v281 = vld [vmem:[#allocation4 + $0x760] sm:$0xff]
    %v282 = vld [vmem:[#allocation4 + $0x768] sm:$0xff]
    %v283 = vld [vmem:[#allocation4 + $0x770] sm:$0xff]
    %v284 = vld [vmem:[#allocation4 + $0x778] sm:$0xff]
    %v285 = vld [vmem:[#allocation4 + $0x780] sm:$0xff]
    %v286 = vld [vmem:[#allocation4 + $0x788] sm:$0xff]
    %v287 = vld [vmem:[#allocation4 + $0x790] sm:$0xff]
    %v288 = vld [vmem:[#allocation4 + $0x798] sm:$0xff]
    %v289 = vld [vmem:[#allocation4 + $0x7a0] sm:$0xff]
    %v290 = vld [vmem:[#allocation4 + $0x7a8] sm:$0xff]
    %v291 = vld [vmem:[#allocation4 + $0x7b0] sm:$0xff]
    %v292 = vld [vmem:[#allocation4 + $0x7b8] sm:$0xff]
    %v293 = vld [vmem:[#allocation4 + $0x7c0] sm:$0xff]
    %v294 = vld [vmem:[#allocation4 + $0x7c8] sm:$0xff]
    %v295 = vld [vmem:[#allocation4 + $0x7d0] sm:$0xff]
    %v296 = vld [vmem:[#allocation4 + $0x7d8] sm:$0xff]
    %v297 = vld [vmem:[#allocation4 + $0x7e0] sm:$0xff]
    %v298 = vld [vmem:[#allocation4 + $0x7e8] sm:$0xff]
    %v299 = vld [vmem:[#allocation4 + $0x7f0] sm:$0xff]
    %v300 = vld [vmem:[#allocation4 + $0x7f8] sm:$0xff]
    %303 = vst [vmem:[#allocation1] ss:$4 sm:$0xff] %v43
    %s304 = scalar_lea.vmem [#allocation1], 32
    %305 = vst [vmem:[%s304] ss:$4 sm:$0xff] %v44
    %v306 = vld.sshfl [vmem:[#allocation1] sm:$0xff pattern:$0x73625140]
    %v307 = vld.sshfl [vmem:[#allocation1 + $0x8] sm:$0xff pattern:$0x73625140]
    %v308 = vld.sshfl [vmem:[#allocation1 + $0x10] sm:$0xff pattern:$0x73625140]
    %v309 = vld.sshfl [vmem:[#allocation1 + $0x18] sm:$0xff pattern:$0x73625140]
    %v310 = vld.sshfl [vmem:[#allocation1 + $0x20] sm:$0xff pattern:$0x73625140]
    %v311 = vld.sshfl [vmem:[#allocation1 + $0x28] sm:$0xff pattern:$0x73625140]
    %v312 = vld.sshfl [vmem:[#allocation1 + $0x30] sm:$0xff pattern:$0x73625140]
    %v313 = vld.sshfl [vmem:[#allocation1 + $0x38] sm:$0xff pattern:$0x73625140]
    %322 = vmatpush.msra.mxu0 %v75
    %323 = vmatpush.msra.mxu0 %v73
    %324 = vmatpush.msra.mxu0 %v71
    %325 = vmatpush.msra.mxu0 %v69
    %326 = vmatpush.msra.mxu0 %v67
    %327 = vmatpush.msra.mxu0 %v65
    %328 = vmatpush.msra.mxu0 %v63
    %329 = vmatpush.msra.mxu0 %v61
    %330 = vmatpush.msra.mxu0 %v59
    %331 = vmatpush.msra.mxu0 %v57
    %332 = vmatpush.msra.mxu0 %v55
    %333 = vmatpush.msra.mxu0 %v53
    %334 = vmatpush.msra.mxu0 %v51
    %335 = vmatpush.msra.mxu0 %v49
    %336 = vmatpush.msra.mxu0 %v47
    %337 = vmatpush.msra.mxu0 %v45
    %338 = vmatmul.f32.gmra.mxu0 %v306
    %v339 = vpop.f32.mrf.mxu0
    %v340 = vadd.f32 0.0, %v339
    %341 = vdwg.mxu0
    %342 = vmatpush.msra.mxu0 %v107
    %343 = vmatpush.msra.mxu0 %v105
    %344 = vmatpush.msra.mxu0 %v103
    %345 = vmatpush.msra.mxu0 %v101
    %346 = vmatpush.msra.mxu0 %v99
    %347 = vmatpush.msra.mxu0 %v97
    %348 = vmatpush.msra.mxu0 %v95
    %349 = vmatpush.msra.mxu0 %v93
    %350 = vmatpush.msra.mxu0 %v91
    %351 = vmatpush.msra.mxu0 %v89
    %352 = vmatpush.msra.mxu0 %v87
    %353 = vmatpush.msra.mxu0 %v85
    %354 = vmatpush.msra.mxu0 %v83
    %355 = vmatpush.msra.mxu0 %v81
    %356 = vmatpush.msra.mxu0 %v79
    %357 = vmatpush.msra.mxu0 %v77
    %358 = vmatmul.f32.gmra.mxu0 %v307
    %v359 = vpop.f32.mrf.mxu0
    %v360 = vadd.f32 %v340, %v359
    %361 = vdwg.mxu0
    %362 = vmatpush.msra.mxu0 %v139
    %363 = vmatpush.msra.mxu0 %v137
    %364 = vmatpush.msra.mxu0 %v135
    %365 = vmatpush.msra.mxu0 %v133
    %366 = vmatpush.msra.mxu0 %v131
    %367 = vmatpush.msra.mxu0 %v129
    %368 = vmatpush.msra.mxu0 %v127
    %369 = vmatpush.msra.mxu0 %v125
    %370 = vmatpush.msra.mxu0 %v123
    %371 = vmatpush.msra.mxu0 %v121
    %372 = vmatpush.msra.mxu0 %v119
    %373 = vmatpush.msra.mxu0 %v117
    %374 = vmatpush.msra.mxu0 %v115
    %375 = vmatpush.msra.mxu0 %v113
    %376 = vmatpush.msra.mxu0 %v111
    %377 = vmatpush.msra.mxu0 %v109
    %378 = vmatmul.f32.gmra.mxu0 %v308
    %v379 = vpop.f32.mrf.mxu0
    %v380 = vadd.f32 %v360, %v379
    %381 = vdwg.mxu0
    %382 = vmatpush.msra.mxu0 %v171
    %383 = vmatpush.msra.mxu0 %v169
    %384 = vmatpush.msra.mxu0 %v167
    %385 = vmatpush.msra.mxu0 %v165
    %386 = vmatpush.msra.mxu0 %v163
    %387 = vmatpush.msra.mxu0 %v161
    %388 = vmatpush.msra.mxu0 %v159
    %389 = vmatpush.msra.mxu0 %v157
    %390 = vmatpush.msra.mxu0 %v155
    %391 = vmatpush.msra.mxu0 %v153
    %392 = vmatpush.msra.mxu0 %v151
    %393 = vmatpush.msra.mxu0 %v149
    %394 = vmatpush.msra.mxu0 %v147
    %395 = vmatpush.msra.mxu0 %v145
    %396 = vmatpush.msra.mxu0 %v143
    %397 = vmatpush.msra.mxu0 %v141
    %398 = vmatmul.f32.gmra.mxu0 %v309
    %v399 = vpop.f32.mrf.mxu0
    %v400 = vadd.f32 %v380, %v399
    %401 = vdwg.mxu0
    %402 = vmatpush.msra.mxu0 %v203
    %403 = vmatpush.msra.mxu0 %v201
    %404 = vmatpush.msra.mxu0 %v199
    %405 = vmatpush.msra.mxu0 %v197
    %406 = vmatpush.msra.mxu0 %v195
    %407 = vmatpush.msra.mxu0 %v193
    %408 = vmatpush.msra.mxu0 %v191
    %409 = vmatpush.msra.mxu0 %v189
    %410 = vmatpush.msra.mxu0 %v187
    %411 = vmatpush.msra.mxu0 %v185
    %412 = vmatpush.msra.mxu0 %v183
    %413 = vmatpush.msra.mxu0 %v181
    %414 = vmatpush.msra.mxu0 %v179
    %415 = vmatpush.msra.mxu0 %v177
    %416 = vmatpush.msra.mxu0 %v175
    %417 = vmatpush.msra.mxu0 %v173
    %418 = vmatmul.f32.gmra.mxu0 %v310
    %v419 = vpop.f32.mrf.mxu0
    %v420 = vadd.f32 %v400, %v419
    %421 = vdwg.mxu0
    %422 = vmatpush.msra.mxu0 %v235
    %423 = vmatpush.msra.mxu0 %v233
    %424 = vmatpush.msra.mxu0 %v231
    %425 = vmatpush.msra.mxu0 %v229
    %426 = vmatpush.msra.mxu0 %v227
    %427 = vmatpush.msra.mxu0 %v225
    %428 = vmatpush.msra.mxu0 %v223
    %429 = vmatpush.msra.mxu0 %v221
    %430 = vmatpush.msra.mxu0 %v219
    %431 = vmatpush.msra.mxu0 %v217
    %432 = vmatpush.msra.mxu0 %v215
    %433 = vmatpush.msra.mxu0 %v213
    %434 = vmatpush.msra.mxu0 %v211
    %435 = vmatpush.msra.mxu0 %v209
    %436 = vmatpush.msra.mxu0 %v207
    %437 = vmatpush.msra.mxu0 %v205
    %438 = vmatmul.f32.gmra.mxu0 %v311
    %v439 = vpop.f32.mrf.mxu0
    %v440 = vadd.f32 %v420, %v439
    %441 = vdwg.mxu0
    %442 = vmatpush.msra.mxu0 %v267
    %443 = vmatpush.msra.mxu0 %v265
    %444 = vmatpush.msra.mxu0 %v263
    %445 = vmatpush.msra.mxu0 %v261
    %446 = vmatpush.msra.mxu0 %v259
    %447 = vmatpush.msra.mxu0 %v257
    %448 = vmatpush.msra.mxu0 %v255
    %449 = vmatpush.msra.mxu0 %v253
    %450 = vmatpush.msra.mxu0 %v251
    %451 = vmatpush.msra.mxu0 %v249
    %452 = vmatpush.msra.mxu0 %v247
    %453 = vmatpush.msra.mxu0 %v245
    %454 = vmatpush.msra.mxu0 %v243
    %455 = vmatpush.msra.mxu0 %v241
    %456 = vmatpush.msra.mxu0 %v239
    %457 = vmatpush.msra.mxu0 %v237
    %458 = vmatmul.f32.gmra.mxu0 %v312
    %v459 = vpop.f32.mrf.mxu0
    %v460 = vadd.f32 %v440, %v459
    %461 = vdwg.mxu0
    %462 = vmatpush.msra.mxu0 %v299
    %463 = vmatpush.msra.mxu0 %v297
    %464 = vmatpush.msra.mxu0 %v295
    %465 = vmatpush.msra.mxu0 %v293
    %466 = vmatpush.msra.mxu0 %v291
    %467 = vmatpush.msra.mxu0 %v289
    %468 = vmatpush.msra.mxu0 %v287
    %469 = vmatpush.msra.mxu0 %v285
    %470 = vmatpush.msra.mxu0 %v283
    %471 = vmatpush.msra.mxu0 %v281
    %472 = vmatpush.msra.mxu0 %v279
    %473 = vmatpush.msra.mxu0 %v277
    %474 = vmatpush.msra.mxu0 %v275
    %475 = vmatpush.msra.mxu0 %v273
    %476 = vmatpush.msra.mxu0 %v271
    %477 = vmatpush.msra.mxu0 %v269
    %478 = vmatmul.f32.gmra.mxu0 %v313
    %v479 = vpop.f32.mrf.mxu0
    %v480 = vadd.f32 %v460, %v479
    %481 = vdwg.mxu0
    %482 = vmatpush.msra.mxu0 %v76
    %483 = vmatpush.msra.mxu0 %v74
    %484 = vmatpush.msra.mxu0 %v72
    %485 = vmatpush.msra.mxu0 %v70
    %486 = vmatpush.msra.mxu0 %v68
    %487 = vmatpush.msra.mxu0 %v66
    %488 = vmatpush.msra.mxu0 %v64
    %489 = vmatpush.msra.mxu0 %v62
    %490 = vmatpush.msra.mxu0 %v60
    %491 = vmatpush.msra.mxu0 %v58
    %492 = vmatpush.msra.mxu0 %v56
    %493 = vmatpush.msra.mxu0 %v54
    %494 = vmatpush.msra.mxu0 %v52
    %495 = vmatpush.msra.mxu0 %v50
    %496 = vmatpush.msra.mxu0 %v48
    %497 = vmatpush.msra.mxu0 %v46
    %498 = vmatmul.f32.gmra.mxu0 %v306
    %v499 = vpop.f32.mrf.mxu0
    %v500 = vadd.f32 0.0, %v499
    %501 = vdwg.mxu0
    %502 = vmatpush.msra.mxu0 %v108
    %503 = vmatpush.msra.mxu0 %v106
    %504 = vmatpush.msra.mxu0 %v104
    %505 = vmatpush.msra.mxu0 %v102
    %506 = vmatpush.msra.mxu0 %v100
    %507 = vmatpush.msra.mxu0 %v98
    %508 = vmatpush.msra.mxu0 %v96
    %509 = vmatpush.msra.mxu0 %v94
    %510 = vmatpush.msra.mxu0 %v92
    %511 = vmatpush.msra.mxu0 %v90
    %512 = vmatpush.msra.mxu0 %v88
    %513 = vmatpush.msra.mxu0 %v86
    %514 = vmatpush.msra.mxu0 %v84
    %515 = vmatpush.msra.mxu0 %v82
    %516 = vmatpush.msra.mxu0 %v80
    %517 = vmatpush.msra.mxu0 %v78
    %518 = vmatmul.f32.gmra.mxu0 %v307
    %v519 = vpop.f32.mrf.mxu0
    %v520 = vadd.f32 %v500, %v519
    %521 = vdwg.mxu0
    %522 = vmatpush.msra.mxu0 %v140
    %523 = vmatpush.msra.mxu0 %v138
    %524 = vmatpush.msra.mxu0 %v136
    %525 = vmatpush.msra.mxu0 %v134
    %526 = vmatpush.msra.mxu0 %v132
    %527 = vmatpush.msra.mxu0 %v130
    %528 = vmatpush.msra.mxu0 %v128
    %529 = vmatpush.msra.mxu0 %v126
    %530 = vmatpush.msra.mxu0 %v124
    %531 = vmatpush.msra.mxu0 %v122
    %532 = vmatpush.msra.mxu0 %v120
    %533 = vmatpush.msra.mxu0 %v118
    %534 = vmatpush.msra.mxu0 %v116
    %535 = vmatpush.msra.mxu0 %v114
    %536 = vmatpush.msra.mxu0 %v112
    %537 = vmatpush.msra.mxu0 %v110
    %538 = vmatmul.f32.gmra.mxu0 %v308
    %v539 = vpop.f32.mrf.mxu0
    %v540 = vadd.f32 %v520, %v539
    %541 = vdwg.mxu0
    %542 = vmatpush.msra.mxu0 %v172
    %543 = vmatpush.msra.mxu0 %v170
    %544 = vmatpush.msra.mxu0 %v168
    %545 = vmatpush.msra.mxu0 %v166
    %546 = vmatpush.msra.mxu0 %v164
    %547 = vmatpush.msra.mxu0 %v162
    %548 = vmatpush.msra.mxu0 %v160
    %549 = vmatpush.msra.mxu0 %v158
    %550 = vmatpush.msra.mxu0 %v156
    %551 = vmatpush.msra.mxu0 %v154
    %552 = vmatpush.msra.mxu0 %v152
    %553 = vmatpush.msra.mxu0 %v150
    %554 = vmatpush.msra.mxu0 %v148
    %555 = vmatpush.msra.mxu0 %v146
    %556 = vmatpush.msra.mxu0 %v144
    %557 = vmatpush.msra.mxu0 %v142
    %558 = vmatmul.f32.gmra.mxu0 %v309
    %v559 = vpop.f32.mrf.mxu0
    %v560 = vadd.f32 %v540, %v559
    %561 = vdwg.mxu0
    %562 = vmatpush.msra.mxu0 %v204
    %563 = vmatpush.msra.mxu0 %v202
    %564 = vmatpush.msra.mxu0 %v200
    %565 = vmatpush.msra.mxu0 %v198
    %566 = vmatpush.msra.mxu0 %v196
    %567 = vmatpush.msra.mxu0 %v194
    %568 = vmatpush.msra.mxu0 %v192
    %569 = vmatpush.msra.mxu0 %v190
    %570 = vmatpush.msra.mxu0 %v188
    %571 = vmatpush.msra.mxu0 %v186
    %572 = vmatpush.msra.mxu0 %v184
    %573 = vmatpush.msra.mxu0 %v182
    %574 = vmatpush.msra.mxu0 %v180
    %575 = vmatpush.msra.mxu0 %v178
    %576 = vmatpush.msra.mxu0 %v176
    %577 = vmatpush.msra.mxu0 %v174
    %578 = vmatmul.f32.gmra.mxu0 %v310
    %v579 = vpop.f32.mrf.mxu0
    %v580 = vadd.f32 %v560, %v579
    %581 = vdwg.mxu0
    %582 = vmatpush.msra.mxu0 %v236
    %583 = vmatpush.msra.mxu0 %v234
    %584 = vmatpush.msra.mxu0 %v232
    %585 = vmatpush.msra.mxu0 %v230
    %586 = vmatpush.msra.mxu0 %v228
    %587 = vmatpush.msra.mxu0 %v226
    %588 = vmatpush.msra.mxu0 %v224
    %589 = vmatpush.msra.mxu0 %v222
    %590 = vmatpush.msra.mxu0 %v220
    %591 = vmatpush.msra.mxu0 %v218
    %592 = vmatpush.msra.mxu0 %v216
    %593 = vmatpush.msra.mxu0 %v214
    %594 = vmatpush.msra.mxu0 %v212
    %595 = vmatpush.msra.mxu0 %v210
    %596 = vmatpush.msra.mxu0 %v208
    %597 = vmatpush.msra.mxu0 %v206
    %598 = vmatmul.f32.gmra.mxu0 %v311
    %v599 = vpop.f32.mrf.mxu0
    %v600 = vadd.f32 %v580, %v599
    %601 = vdwg.mxu0
    %602 = vmatpush.msra.mxu0 %v268
    %603 = vmatpush.msra.mxu0 %v266
    %604 = vmatpush.msra.mxu0 %v264
    %605 = vmatpush.msra.mxu0 %v262
    %606 = vmatpush.msra.mxu0 %v260
    %607 = vmatpush.msra.mxu0 %v258
    %608 = vmatpush.msra.mxu0 %v256
    %609 = vmatpush.msra.mxu0 %v254
    %610 = vmatpush.msra.mxu0 %v252
    %611 = vmatpush.msra.mxu0 %v250
    %612 = vmatpush.msra.mxu0 %v248
    %613 = vmatpush.msra.mxu0 %v246
    %614 = vmatpush.msra.mxu0 %v244
    %615 = vmatpush.msra.mxu0 %v242
    %616 = vmatpush.msra.mxu0 %v240
    %617 = vmatpush.msra.mxu0 %v238
    %618 = vmatmul.f32.gmra.mxu0 %v312
    %v619 = vpop.f32.mrf.mxu0
    %v620 = vadd.f32 %v600, %v619
    %621 = vdwg.mxu0
    %622 = vmatpush.msra.mxu0 %v300
    %623 = vmatpush.msra.mxu0 %v298
    %624 = vmatpush.msra.mxu0 %v296
    %625 = vmatpush.msra.mxu0 %v294
    %626 = vmatpush.msra.mxu0 %v292
    %627 = vmatpush.msra.mxu0 %v290
    %628 = vmatpush.msra.mxu0 %v288
    %629 = vmatpush.msra.mxu0 %v286
    %630 = vmatpush.msra.mxu0 %v284
    %631 = vmatpush.msra.mxu0 %v282
    %632 = vmatpush.msra.mxu0 %v280
    %633 = vmatpush.msra.mxu0 %v278
    %634 = vmatpush.msra.mxu0 %v276
    %635 = vmatpush.msra.mxu0 %v274
    %636 = vmatpush.msra.mxu0 %v272
    %637 = vmatpush.msra.mxu0 %v270
    %638 = vmatmul.f32.gmra.mxu0 %v313
    %v639 = vpop.f32.mrf.mxu0
    %v640 = vadd.f32 %v620, %v639
    %641 = vdwg.mxu0
    %v644 = vrot.slane %v640, 6
    %vm645 = vcmask 1041408
    %v646 = vsel %vm645, %v480, %v644
    %v648 = vadd.f32 %v42, %v646
    %649 = vst [vmem:[#allocation2] sm:$0xf] %v648
    // Predicated region
    $region30: #{global_quality.1} parent=1 // pred_check
      %p650 = pneg %p37
    $region31: #{global_quality.1} parent=1 // pred_check_branch
      %652 = sbr.rel (%p650) target = $region33
    $region32: #{global_quality.1} parent=1 // pred_region
      %v653 = vld [vmem:[#allocation2] sm:$0xf]
      %v654 = vld [vmem:[%s2] sm:$0x3]
      %v656 = vperm.slane %v654, 0
      %v657 = vperm.slane %v654, 1
      %v658 = vrot.slane %v657, 6
      %v659 = vsel %vm645, %v656, %v658
      %v661 = vadd.f32 %v653, %v659
      %v662 = vmax.f32 %v661, 0.0
      %v663 = vld [vmem:[%s3] sm:$0x3]
      %v665 = vperm.slane %v663, 0
      %v666 = vperm.slane %v663, 1
      %v667 = vrot.slane %v666, 6
      %v668 = vsel %vm645, %v665, %v667
      %v670 = vmul.f32 %v662, %v668
      %672 = vst [vmem:[#allocation1] ss:$4 sm:$0xff] %v670
      %v673 = vld.sshfl [vmem:[#allocation1] sm:$0xff pattern:$0x73625140]
      %v674 = vld.sshfl [vmem:[#allocation1 + $0x8] sm:$0xff pattern:$0x73625140]
      %v677 = vsel %vm645, %v673, 0.0
      %v678 = vsel %vm645, %v674, 0.0
      %v679 = vadd.f32 %v677, %v678
      %680 = vadd.xlane.f32.xlu0 %v679
      %v681 = vpop.xlane.xlu0 %680
      %s682 = sld [smem:[#allocation3]]
      %v683 = vstv %s682
      %v684 = vadd.f32 %v681, %v683
      %v685 = vmax.f32 %v684, 0.0
      %vm686 = vcmask 1024
      %687 = vst.msk [vmem:[%s5] sm:$0x3] %vm686, %v685
    $region33: #{global_quality.1} parent=1 // pred_fallthru
      _
    // Predicated region
    $region34: #{global_quality.1} parent=1 // pred_check
      _
    $region35: #{global_quality.1} parent=1 // pred_check_branch
      %689 = sbr.rel (0) target = $region37
    $region36: #{global_quality.1} parent=1 // pred_region
      _
    $region37: #{global_quality.1} parent=1 // pred_fallthru
      _
    // Predicated region
    $region38: #{global_quality.1} parent=1 // pred_check
      _
    $region39: #{global_quality.1} parent=1 // pred_check_branch
      %691 = sbr.rel (0) target = $region41
    $region40: #{global_quality.1} parent=1 // pred_region
      _
    $region41: #{global_quality.1} parent=1 // pred_fallthru
      _
    %692 = vsyncpa [#allocation5], 1

</llo_original>
